<compile_context>
chip_gen: v6e
topology: v6e:2x2x1
jax: 0.10.0
libtpu: 0.0.40
codegen_flags: <defaults>
</compile_context>

<pallas_src>
import functools

import jax
import jax.numpy as jnp
from jax import lax
from jax.experimental import pallas as pl
from jax.experimental.pallas import tpu as pltpu


def _vq_kernel(z_ref, e_ref, et_ref, esq_ref, zq_ref, idx_ref, part_ref):
    """One (batch, spatial-chunk) tile, channel-major / lane-dense.

    z_ref   : (1, D, TN)  input, channels on sublanes, spatial positions on lanes
    e_ref   : (K, D)      full codebook
    et_ref  : (D, K)      codebook transposed (precomputed in wrapper)
    esq_ref : (K, 1)      per-code squared norms (precomputed in wrapper)
    zq_ref  : (1, D, TN)  quantized output (forward value of straight-through)
    idx_ref : (1, 1, TN)  argmin codebook indices (int32)
    part_ref: (1, 2, TN)  loss partials: row0 = sum_c diff, row1 = sum_c diff^2
    """
    z = z_ref[0].astype(jnp.float32)        # (D, TN)
    e = e_ref[...].astype(jnp.float32)      # (K, D)
    e_t = et_ref[...].astype(jnp.float32)   # (D, K)
    e_sq = esq_ref[...]                     # (K, 1), f32
    n_e = e.shape[0]
    tn = z.shape[1]

    # Scores: s[k, n] = ||e_k||^2 - 2 <e_k, z_n>.  ||z_n||^2 is constant over k,
    # so dropping it does not change the argmin.
    ze = lax.dot_general(e, z, (((1,), (0,)), ((), ())),
                         preferred_element_type=jnp.float32)     # (K, TN)
    s = e_sq - 2.0 * ze                                          # (K, TN)

    # argmin over the codebook (sublane axis), first-occurrence tie-break
    # (matches torch.argmin / jnp.argmin).
    smin = jnp.min(s, axis=0, keepdims=True)                      # (1, TN)
    krow = lax.broadcasted_iota(jnp.int32, s.shape, 0)            # (K, TN)
    idx = jnp.min(jnp.where(s == smin, krow, n_e),
                  axis=0, keepdims=True)                          # (1, TN) int32
    idx_ref[...] = idx[None].astype(jnp.int32)

    # Codebook gather via one-hot matmul (MXU-friendly): zq[d, n] = e[idx[n], d].
    onehot = (krow == idx).astype(jnp.float32)                    # (K, TN)
    zq = lax.dot_general(e_t, onehot, (((1,), (0,)), ((), ())),
                         preferred_element_type=jnp.float32)      # (D, TN)
    zq_ref[...] = zq[None].astype(zq_ref.dtype)

    # Lane-dense loss partials; final scalar reduction happens in the wrapper.
    diff = zq - z                                                 # (D, TN)
    dsum = jnp.sum(diff, axis=0, keepdims=True)                   # (1, TN)
    dsq = jnp.sum(diff * diff, axis=0, keepdims=True)             # (1, TN)
    rows = lax.broadcasted_iota(jnp.int32, (2, tn), 0)
    part_ref[...] = jnp.where(rows == 0, dsum, dsq)[None]         # (1, 2, TN)


def _pick_tile(hw):
    """Largest lane-dense spatial chunk per batch (full H*W when it is small)."""
    max_tn = 32768                      # D*tn*4 B per buffer: far below VMEM on v5e/v6e/v7x
    if hw <= max_tn:
        return hw
    assert hw % 128 == 0, "H*W must be a multiple of 128 when spatial tiling is required"
    tn = max_tn
    while hw % tn != 0:
        tn -= 128
    return tn


@functools.partial(jax.jit, static_argnames=("beta",))
def vector_quantize2_forward(z, embedding, *, beta=0.25):
    """Pallas implementation of VectorQuantize2.forward (legacy=True, remap=None,
    sane_index_shape=False).

    z         : (B, C, H, W) float32, C == e_dim   (NCHW, like the PyTorch module)
    embedding : (n_e, e_dim) float32 codebook

    Returns (z_q NCHW, loss scalar, (None, None, min_encoding_indices (B*H*W,) int32)).
    """
    B, C, H, W = z.shape
    n_e, e_dim = embedding.shape
    assert C == e_dim
    hw = H * W
    tn = _pick_tile(hw)

    # Channel-major view: (B, C, H, W) -> (B, C, H*W) is a pure reshape (no transpose).
    z3 = z.reshape(B, C, hw).astype(jnp.float32)
    e = embedding.astype(jnp.float32)
    e_t = e.T                                        # (D, K)
    e_sq = jnp.sum(e * e, axis=1, keepdims=True)     # (K, 1), hoisted out of the kernel

    grid = (B, hw // tn)

    zq3, idx3, partials = pl.pallas_call(
        _vq_kernel,
        out_shape=(
            jax.ShapeDtypeStruct((B, C, hw), jnp.float32),
            jax.ShapeDtypeStruct((B, 1, hw), jnp.int32),
            jax.ShapeDtypeStruct((B, 2, hw), jnp.float32),
        ),
        grid_spec=pltpu.PrefetchScalarGridSpec(
            num_scalar_prefetch=0,
            grid=grid,
            in_specs=[
                pl.BlockSpec((1, C, tn), lambda b, j: (b, 0, j)),
                pl.BlockSpec((n_e, e_dim), lambda b, j: (0, 0)),
                pl.BlockSpec((e_dim, n_e), lambda b, j: (0, 0)),
                pl.BlockSpec((n_e, 1), lambda b, j: (0, 0)),
            ],
            out_specs=[
                pl.BlockSpec((1, C, tn), lambda b, j: (b, 0, j)),
                pl.BlockSpec((1, 1, tn), lambda b, j: (b, 0, j)),
                pl.BlockSpec((1, 2, tn), lambda b, j: (b, 0, j)),
            ],
        ),
        compiler_params=pltpu.CompilerParams(
            dimension_semantics=("parallel", "parallel")),
    )(z3, e, e_t, e_sq)

    total = B * hw * C
    s_diff = jnp.sum(partials[:, 0, :])
    s_sq = jnp.sum(partials[:, 1, :])
    mean_diff = s_diff / total
    mean_sq = s_sq / total
    # Legacy loss exactly as written in the spec module:
    #   torch.mean(torch.mean(z_q.detach() - z) ** 2) + beta * torch.mean((z_q - z.detach()) ** 2)
    # i.e. (mean of diff)^2 + beta * mean(diff^2).  (Upstream taming-transformers uses
    # mean(diff^2) for the first term; we follow the provided module source.)
    loss = mean_diff ** 2 + beta * mean_sq

    # Straight-through estimator: forward value of z + (z_q - z).detach() is z_q.
    z_q = zq3.reshape(B, C, H, W)                    # already channel-major: no transpose
    min_encoding_indices = idx3.reshape(-1)          # ordered (b, h, w) like the torch view
    # TODO(synk): remap_to_used / sane_index_shape branches are not exercised here
    # (remap=None, sane_index_shape=False), so they are not implemented.
    return z_q, loss, (None, None, min_encoding_indices)


def _reference_forward(z, embedding, beta):
    """Pure-JAX reference mirroring the PyTorch forward (legacy loss, as written)."""
    z_nhwc = jnp.transpose(z, (0, 2, 3, 1))
    zf = z_nhwc.reshape(-1, embedding.shape[1])
    d = (jnp.sum(zf ** 2, axis=1, keepdims=True)
         + jnp.sum(embedding ** 2, axis=1)[None, :]
         - 2.0 * zf @ embedding.T)
    idx = jnp.argmin(d, axis=1)
    zq = embedding[idx].reshape(z_nhwc.shape)
    diff = zq - z_nhwc
    loss = jnp.mean(diff) ** 2 + beta * jnp.mean(diff ** 2)
    zq = jnp.transpose(zq, (0, 3, 1, 2))
    return zq, loss, idx.astype(jnp.int32)


if __name__ == "__main__":
    # Module config: n_e=16 codebook entries of dim e_dim=4, beta=0.25
    n_e, e_dim, beta = 16, 4, 0.25
    B, C, H, W = 2, e_dim, 16, 16

    key = jax.random.PRNGKey(0)
    k_z, k_emb = jax.random.split(key)
    z = jax.random.normal(k_z, (B, C, H, W), dtype=jnp.float32)
    # nn.Embedding default init is N(0, 1)
    embedding = jax.random.normal(k_emb, (n_e, e_dim), dtype=jnp.float32)

    z_q, loss, (_, _, indices) = vector_quantize2_forward(z, embedding, beta=beta)
    jax.block_until_ready((z_q, loss, indices))

    zq_ref, loss_ref, idx_ref = _reference_forward(z, embedding, beta)
    assert z_q.shape == (B, C, H, W) and z_q.dtype == jnp.float32
    assert indices.shape == (B * H * W,)
    assert jnp.allclose(z_q, zq_ref, atol=1e-5, rtol=1e-5)
    assert jnp.allclose(loss, loss_ref, atol=1e-5, rtol=1e-5)
    assert jnp.all(indices == idx_ref)

    print("KERNEL_OK")
</pallas_src>

<mosaic_0001>
module attributes {stable_mosaic.version = 11 : i64} {
  func.func @_vq_kernel(%arg0: i32, %arg1: i32, %arg2: memref<1x4x256xf32, #tpu.memory_space<vmem>>, %arg3: memref<16x4xf32, #tpu.memory_space<vmem>>, %arg4: memref<4x16xf32, #tpu.memory_space<vmem>>, %arg5: memref<16x1xf32, #tpu.memory_space<vmem>>, %arg6: memref<1x4x256xf32, #tpu.memory_space<vmem>>, %arg7: memref<1x1x256xi32, #tpu.memory_space<vmem>>, %arg8: memref<1x2x256xf32, #tpu.memory_space<vmem>>) attributes {dimension_semantics = [#tpu.dimension_semantics<parallel>, #tpu.dimension_semantics<parallel>], iteration_bounds = array<i64: 2, 1>, scalar_prefetch = 0 : i64, scratch_operands = 0 : i64, tpu.core_type = #tpu.core_type<tc>, window_params = [{transform_indices = @transform_0, window_bounds = array<i64: 1, 4, 256>}, {pipeline_mode = #tpu.pipeline_mode<synchronous>, transform_indices = @transform_1, window_bounds = array<i64: 16, 4>}, {pipeline_mode = #tpu.pipeline_mode<synchronous>, transform_indices = @transform_2, window_bounds = array<i64: 4, 16>}, {pipeline_mode = #tpu.pipeline_mode<synchronous>, transform_indices = @transform_3, window_bounds = array<i64: 16, 1>}, {transform_indices = @transform_4, window_bounds = array<i64: 1, 4, 256>}, {transform_indices = @transform_5, window_bounds = array<i64: 1, 1, 256>}, {transform_indices = @transform_6, window_bounds = array<i64: 1, 2, 256>}]} {
    %c0 = arith.constant 0 : index
    %c0_0 = arith.constant 0 : index
    %c0_1 = arith.constant 0 : index
    %0 = vector.load %arg2[%c0, %c0_0, %c0_1] : memref<1x4x256xf32, #tpu.memory_space<vmem>>, vector<1x4x256xf32>
    %1 = vector.shape_cast %0 : vector<1x4x256xf32> to vector<4x256xf32>
    %c0_2 = arith.constant 0 : index
    %c0_3 = arith.constant 0 : index
    %2 = vector.load %arg3[%c0_2, %c0_3] : memref<16x4xf32, #tpu.memory_space<vmem>>, vector<16x4xf32>
    %c0_4 = arith.constant 0 : index
    %c0_5 = arith.constant 0 : index
    %3 = vector.load %arg4[%c0_4, %c0_5] : memref<4x16xf32, #tpu.memory_space<vmem>>, vector<4x16xf32>
    %c0_6 = arith.constant 0 : index
    %c0_7 = arith.constant 0 : index
    %4 = vector.load %arg5[%c0_6, %c0_7] : memref<16x1xf32, #tpu.memory_space<vmem>>, vector<16x1xf32>
    %cst = arith.constant dense<0.000000e+00> : vector<16x256xf32>
    %5 = tpu.matmul %2, %1, %cst {dimension_numbers = #tpu.dot_dimension_numbers<[1], [0], [0], [1], [0, 0, 1, 1], [], []>} : vector<16x4xf32>, vector<4x256xf32>, vector<16x256xf32> -> vector<16x256xf32>
    %cst_8 = arith.constant 2.000000e+00 : f32
    %6 = vector.broadcast %cst_8 : f32 to vector<16x256xf32>
    %7 = arith.mulf %6, %5 : vector<16x256xf32>
    %8 = vector.broadcast %4 : vector<16x1xf32> to vector<16x256xf32>
    %9 = arith.subf %8, %7 : vector<16x256xf32>
    %cst_9 = arith.constant dense<0x7F800000> : vector<256xf32>
    %10 = vector.multi_reduction <minimumf>, %9, %cst_9 [0] : vector<16x256xf32> to vector<256xf32>
    %11 = vector.shape_cast %10 : vector<256xf32> to vector<1x256xf32>
    %12 = tpu.iota {dimensions = array<i32: 0>} : vector<16x256xi32>
    %13 = vector.broadcast %11 : vector<1x256xf32> to vector<16x256xf32>
    %14 = arith.cmpf oeq, %9, %13 : vector<16x256xf32>
    %c16_i32 = arith.constant 16 : i32
    %15 = vector.broadcast %c16_i32 : i32 to vector<16x256xi32>
    %16 = arith.select %14, %12, %15 : vector<16x256xi1>, vector<16x256xi32>
    %cst_10 = arith.constant dense<2147483647> : vector<256xi32>
    %17 = vector.multi_reduction <minsi>, %16, %cst_10 [0] : vector<16x256xi32> to vector<256xi32>
    %18 = vector.shape_cast %17 : vector<256xi32> to vector<1x256xi32>
    %19 = vector.shape_cast %18 : vector<1x256xi32> to vector<1x1x256xi32>
    %c0_11 = arith.constant 0 : index
    %c0_12 = arith.constant 0 : index
    %c0_13 = arith.constant 0 : index
    %20 = vector.load %arg7[%c0_11, %c0_12, %c0_13] : memref<1x1x256xi32, #tpu.memory_space<vmem>>, vector<1x1x256xi32>
    tpu.vector_store %arg7[%c0_11, %c0_12, %c0_13], %19 {strides = array<i32>} : memref<1x1x256xi32, #tpu.memory_space<vmem>>, vector<1x1x256xi32>,
    %21 = vector.broadcast %18 : vector<1x256xi32> to vector<16x256xi32>
    %22 = arith.cmpi eq, %12, %21 : vector<16x256xi32>
    %23 = arith.extui %22 : vector<16x256xi1> to vector<16x256xi32>
    %24 = arith.sitofp %23 : vector<16x256xi32> to vector<16x256xf32>
    %cst_14 = arith.constant dense<0.000000e+00> : vector<4x256xf32>
    %25 = tpu.matmul %3, %24, %cst_14 {dimension_numbers = #tpu.dot_dimension_numbers<[1], [0], [0], [1], [0, 0, 1, 1], [], []>} : vector<4x16xf32>, vector<16x256xf32>, vector<4x256xf32> -> vector<4x256xf32>
    %26 = vector.shape_cast %25 : vector<4x256xf32> to vector<1x4x256xf32>
    %c0_15 = arith.constant 0 : index
    %c0_16 = arith.constant 0 : index
    %c0_17 = arith.constant 0 : index
    %27 = vector.load %arg6[%c0_15, %c0_16, %c0_17] : memref<1x4x256xf32, #tpu.memory_space<vmem>>, vector<1x4x256xf32>
    tpu.vector_store %arg6[%c0_15, %c0_16, %c0_17], %26 {strides = array<i32>} : memref<1x4x256xf32, #tpu.memory_space<vmem>>, vector<1x4x256xf32>,
    %28 = arith.subf %25, %1 : vector<4x256xf32>
    %cst_18 = arith.constant dense<0.000000e+00> : vector<256xf32>
    %29 = vector.multi_reduction <add>, %28, %cst_18 [0] : vector<4x256xf32> to vector<256xf32>
    %30 = vector.shape_cast %29 : vector<256xf32> to vector<1x256xf32>
    %31 = arith.mulf %28, %28 : vector<4x256xf32>
    %cst_19 = arith.constant dense<0.000000e+00> : vector<256xf32>
    %32 = vector.multi_reduction <add>, %31, %cst_19 [0] : vector<4x256xf32> to vector<256xf32>
    %33 = vector.shape_cast %32 : vector<256xf32> to vector<1x256xf32>
    %34 = tpu.iota {dimensions = array<i32: 0>} : vector<2x256xi32>
    %c0_i32 = arith.constant 0 : i32
    %35 = vector.broadcast %c0_i32 : i32 to vector<2x256xi32>
    %36 = arith.cmpi eq, %34, %35 : vector<2x256xi32>
    %37 = vector.shape_cast %30 : vector<1x256xf32> to vector<1x256xf32>
    %38 = vector.broadcast %37 : vector<1x256xf32> to vector<2x256xf32>
    %39 = vector.shape_cast %33 : vector<1x256xf32> to vector<1x256xf32>
    %40 = vector.broadcast %39 : vector<1x256xf32> to vector<2x256xf32>
    %41 = arith.select %36, %38, %40 : vector<2x256xi1>, vector<2x256xf32>
    %42 = vector.shape_cast %41 : vector<2x256xf32> to vector<1x2x256xf32>
    %c0_20 = arith.constant 0 : index
    %c0_21 = arith.constant 0 : index
    %c0_22 = arith.constant 0 : index
    %43 = vector.load %arg8[%c0_20, %c0_21, %c0_22] : memref<1x2x256xf32, #tpu.memory_space<vmem>>, vector<1x2x256xf32>
    tpu.vector_store %arg8[%c0_20, %c0_21, %c0_22], %42 {strides = array<i32>} : memref<1x2x256xf32, #tpu.memory_space<vmem>>, vector<1x2x256xf32>,
    return
  }
  func.func @transform_0(%arg0: i32, %arg1: i32) -> (i32, i32, i32) {
    %c0_i32 = arith.constant 0 : i32
    %c0_i32_0 = arith.constant 0 : i32
    return %arg0, %c0_i32, %arg1 : i32, i32, i32
  }
  func.func @transform_1(%arg0: i32, %arg1: i32) -> (i32, i32) {
    %c0_i32 = arith.constant 0 : i32
    %c0_i32_0 = arith.constant 0 : i32
    %c0_i32_1 = arith.constant 0 : i32
    return %c0_i32, %c0_i32_0 : i32, i32
  }
  func.func @transform_2(%arg0: i32, %arg1: i32) -> (i32, i32) {
    %c0_i32 = arith.constant 0 : i32
    %c0_i32_0 = arith.constant 0 : i32
    %c0_i32_1 = arith.constant 0 : i32
    return %c0_i32, %c0_i32_0 : i32, i32
  }
  func.func @transform_3(%arg0: i32, %arg1: i32) -> (i32, i32) {
    %c0_i32 = arith.constant 0 : i32
    %c0_i32_0 = arith.constant 0 : i32
    %c0_i32_1 = arith.constant 0 : i32
    return %c0_i32, %c0_i32_0 : i32, i32
  }
  func.func @transform_4(%arg0: i32, %arg1: i32) -> (i32, i32, i32) {
    %c0_i32 = arith.constant 0 : i32
    %c0_i32_0 = arith.constant 0 : i32
    return %arg0, %c0_i32, %arg1 : i32, i32, i32
  }
  func.func @transform_5(%arg0: i32, %arg1: i32) -> (i32, i32, i32) {
    %c0_i32 = arith.constant 0 : i32
    %c0_i32_0 = arith.constant 0 : i32
    return %arg0, %c0_i32, %arg1 : i32, i32, i32
  }
  func.func @transform_6(%arg0: i32, %arg1: i32) -> (i32, i32, i32) {
    %c0_i32 = arith.constant 0 : i32
    %c0_i32_0 = arith.constant 0 : i32
    return %arg0, %c0_i32, %arg1 : i32, i32, i32
  }
}

</mosaic_0001>

<llo_original>
// kernel: vector_quantize2_forward.1
$region0: #{vector_quantize2_forward.1}
  #allocation0 [shape = 'u32[]', space=smem, size = 0x4, offset = 0x4, fixed_abs, tag = 'smem constant byte address 0x4 - core index']
  #allocation1 [shape = 'u32[144,128]{1,0:T(1,128)}', space=vmem, size = 0x12000, scoped, tag = 'internal scratch']
  %s0 = inlined_call_operand.vmem [shape: f32[2,4,256], index: 0, kind: input, shape index: {}]
  %s1 = inlined_call_operand.vmem [shape: f32[16,4], index: 1, kind: input, shape index: {}]
  %s2 = inlined_call_operand.vmem [shape: f32[4,16], index: 2, kind: input, shape index: {}]
  %s3 = inlined_call_operand.vmem [shape: f32[16,1], index: 3, kind: input, shape index: {}]
  %s4 = inlined_call_operand.vmem [shape: f32[2,4,256], index: 4, kind: output, shape index: {0}]
  %s5 = inlined_call_operand.hbm [shape: s32[2,1,256], index: 5, kind: output, shape index: {1}]
  %s6 = inlined_call_operand.vmem [shape: f32[2,2,256], index: 6, kind: output, shape index: {2}]
  %7 = xla_tuple %s4, %s5, %s6
  %s8 = sld [smem:[#allocation0]]
  $region65: #{vector_quantize2_forward.1} parent=0
    _
  %s10 = ssub.s32 1, %s8
  %s11 = scalar_select 0, %s10, %s8
  $region1: #{vector_quantize2_forward.1} parent=0
    #allocation2 [shape = 'u8[2048]{0}', space=vmem, size = 0x800, scoped, tag = 'output window, operand 1']
    #allocation3 [shape = 's32[2]{0}', space=sflag, size = 0x8, scoped, tag = 'scoped memory for vector_quantize2_forward.1']
    %12 = vsyncpa [#allocation3], 0
    %s13 = scalar_lea.sflag [#allocation3], 1
    %14 = vsyncpa %s13, 0
    loop: start=0, step=1, limit=4
    $region2: #{vector_quantize2_forward.1} parent=1 // loop_pre_header
      _
    $region3: #{vector_quantize2_forward.1} parent=1 // loop_header
      %s16 = sphi 0, %s20
      %p17 = scmp.ge.s32.totalorder %s16, 4
      %s23 = sphi 0, %s35
      %s24 = sphi 0, %s31
      %s25 = sphi 0, %s23
      %s26 = sphi 0, %s24
      %s27 = sphi 0, %s25
      %s28 = sphi 0, %s26
      %s40 = sphi 0, %s42
      %s43 = sphi 0, %s40
      %s44 = sphi 0, %s43
      %s60 = sphi 0, %s44
      %s64 = sphi 0, %s64
      %s66 = sphi 0, %s64
      %s67 = sphi 0, %s66
      %s81 = sphi 0, %s67
      %s85 = sphi 0, %s85
      %s87 = sphi 0, %s85
      %s88 = sphi 0, %s87
      %s102 = sphi 0, %s88
      %s106 = sphi 0, %s106
      %s108 = sphi 0, %s106
      %s109 = sphi 0, %s108
      %s123 = sphi 0, %s109
      %s131 = sphi 0, %s133
      %s134 = sphi 0, %s131
      %s135 = sphi 0, %s134
      %s151 = sphi 0, %s135
      %s159 = sphi 0, %s161
      %s162 = sphi 0, %s159
      %s163 = sphi 0, %s162
      %s179 = sphi 0, %s163
      %s187 = sphi 0, %s189
      %s190 = sphi 0, %s187
      %s191 = sphi 0, %s190
      %s207 = sphi 0, %s191
    $region4: #{vector_quantize2_forward.1} parent=1 // loop_header_branch
      %19 = sbr.rel (%p17) target = $region8
    $region5: #{vector_quantize2_forward.1} parent=1 // loop_body
      %s21 = ssub.s32 %s16, 1
      %s22 = ssub.s32 %s16, 2
      %s29 = sadd.s32 1, %s24
      %p30 = scmp.ge.s32.totalorder %s29, 1
      %s31 = scalar_select %p30, 0, %s29
      %s32 = sadd.s32 1, %s23
      %s33 = scalar_select %p30, %s32, %s23
      %p34 = scmp.ge.s32.totalorder %s33, 2
      %s35 = scalar_select %p34, 0, %s33
      %s36 = ssub.s32 %s23, %s35
      %s37 = ssub.s32 %s24, %s31
      %s38 = sor.u32 %s36, %s37
      %p39 = scmp.eq.s32.totalorder %s38, 0
      %s41 = sadd.s32 %s40, 1
      %s42 = scalar_select %p39, %s40, %s41
      %p45 = pneg %p39
      %p46 = scmp.eq.s32.totalorder %s16, 1
      %p47 = por %p45, %p46
      %p48 = scmp.ne.s32.totalorder %s40, %s43
      %p49 = scmp.eq.s32.totalorder %s16, 0
      %p50 = por %p48, %p49
      %p51 = scmp.ne.s32.totalorder %s40, %s43
      %p52 = scmp.eq.s32.totalorder %s21, 1
      %p53 = por %p51, %p52
      %p54 = scmp.ne.s32.totalorder %s43, %s44
      %p55 = scmp.eq.s32.totalorder %s21, 0
      %p56 = por %p54, %p55
      %p57 = scmp.ne.s32.totalorder %s43, %s44
      %p58 = scmp.eq.s32.totalorder %s22, 1
      %p59 = por %p57, %p58
      %p61 = scmp.ne.s32.totalorder %s44, %s60
      %p62 = scmp.eq.s32.totalorder %s22, 0
      %p63 = por %p61, %p62
      %s65 = sadd.s32 %s64, 1
      %p68 = scmp.eq.s32.totalorder %s16, 1
      %p69 = scmp.ne.s32.totalorder %s64, %s66
      %p70 = scmp.eq.s32.totalorder %s16, 0
      %p71 = por %p69, %p70
      %p72 = scmp.ne.s32.totalorder %s64, %s66
      %p73 = scmp.eq.s32.totalorder %s21, 1
      %p74 = por %p72, %p73
      %p75 = scmp.ne.s32.totalorder %s66, %s67
      %p76 = scmp.eq.s32.totalorder %s21, 0
      %p77 = por %p75, %p76
      %p78 = scmp.ne.s32.totalorder %s66, %s67
      %p79 = scmp.eq.s32.totalorder %s22, 1
      %p80 = por %p78, %p79
      %p82 = scmp.ne.s32.totalorder %s67, %s81
      %p83 = scmp.eq.s32.totalorder %s22, 0
      %p84 = por %p82, %p83
      %s86 = sadd.s32 %s85, 1
      %p89 = scmp.eq.s32.totalorder %s16, 1
      %p90 = scmp.ne.s32.totalorder %s85, %s87
      %p91 = scmp.eq.s32.totalorder %s16, 0
      %p92 = por %p90, %p91
      %p93 = scmp.ne.s32.totalorder %s85, %s87
      %p94 = scmp.eq.s32.totalorder %s21, 1
      %p95 = por %p93, %p94
      %p96 = scmp.ne.s32.totalorder %s87, %s88
      %p97 = scmp.eq.s32.totalorder %s21, 0
      %p98 = por %p96, %p97
      %p99 = scmp.ne.s32.totalorder %s87, %s88
      %p100 = scmp.eq.s32.totalorder %s22, 1
      %p101 = por %p99, %p100
      %p103 = scmp.ne.s32.totalorder %s88, %s102
      %p104 = scmp.eq.s32.totalorder %s22, 0
      %p105 = por %p103, %p104
      %s107 = sadd.s32 %s106, 1
      %p110 = scmp.eq.s32.totalorder %s16, 1
      %p111 = scmp.ne.s32.totalorder %s106, %s108
      %p112 = scmp.eq.s32.totalorder %s16, 0
      %p113 = por %p111, %p112
      %p114 = scmp.ne.s32.totalorder %s106, %s108
      %p115 = scmp.eq.s32.totalorder %s21, 1
      %p116 = por %p114, %p115
      %p117 = scmp.ne.s32.totalorder %s108, %s109
      %p118 = scmp.eq.s32.totalorder %s21, 0
      %p119 = por %p117, %p118
      %p120 = scmp.ne.s32.totalorder %s108, %s109
      %p121 = scmp.eq.s32.totalorder %s22, 1
      %p122 = por %p120, %p121
      %p124 = scmp.ne.s32.totalorder %s109, %s123
      %p125 = scmp.eq.s32.totalorder %s22, 0
      %p126 = por %p124, %p125
      %s127 = ssub.s32 %s23, %s35
      %s128 = ssub.s32 %s24, %s31
      %s129 = sor.u32 %s127, %s128
      %p130 = scmp.eq.s32.totalorder %s129, 0
      %s132 = sadd.s32 %s131, 1
      %s133 = scalar_select %p130, %s131, %s132
      %p136 = pneg %p130
      %p137 = scmp.eq.s32.totalorder %s16, 1
      %p138 = por %p136, %p137
      %p139 = scmp.ne.s32.totalorder %s131, %s134
      %p140 = scmp.eq.s32.totalorder %s16, 0
      %p141 = por %p139, %p140
      %p142 = scmp.ne.s32.totalorder %s131, %s134
      %p143 = scmp.eq.s32.totalorder %s21, 1
      %p144 = por %p142, %p143
      %p145 = scmp.ne.s32.totalorder %s134, %s135
      %p146 = scmp.eq.s32.totalorder %s21, 0
      %p147 = por %p145, %p146
      %p148 = scmp.ne.s32.totalorder %s134, %s135
      %p149 = scmp.eq.s32.totalorder %s22, 1
      %p150 = por %p148, %p149
      %p152 = scmp.ne.s32.totalorder %s135, %s151
      %p153 = scmp.eq.s32.totalorder %s22, 0
      %p154 = por %p152, %p153
      %s155 = ssub.s32 %s23, %s35
      %s156 = ssub.s32 %s24, %s31
      %s157 = sor.u32 %s155, %s156
      %p158 = scmp.eq.s32.totalorder %s157, 0
      %s160 = sadd.s32 %s159, 1
      %s161 = scalar_select %p158, %s159, %s160
      %p164 = pneg %p158
      %p165 = scmp.eq.s32.totalorder %s16, 1
      %p166 = por %p164, %p165
      %p167 = scmp.ne.s32.totalorder %s159, %s162
      %p168 = scmp.eq.s32.totalorder %s16, 0
      %p169 = por %p167, %p168
      %p170 = scmp.ne.s32.totalorder %s159, %s162
      %p171 = scmp.eq.s32.totalorder %s21, 1
      %p172 = por %p170, %p171
      %p173 = scmp.ne.s32.totalorder %s162, %s163
      %p174 = scmp.eq.s32.totalorder %s21, 0
      %p175 = por %p173, %p174
      %p176 = scmp.ne.s32.totalorder %s162, %s163
      %p177 = scmp.eq.s32.totalorder %s22, 1
      %p178 = por %p176, %p177
      %p180 = scmp.ne.s32.totalorder %s163, %s179
      %p181 = scmp.eq.s32.totalorder %s22, 0
      %p182 = por %p180, %p181
      %s183 = ssub.s32 %s23, %s35
      %s184 = ssub.s32 %s24, %s31
      %s185 = sor.u32 %s183, %s184
      %p186 = scmp.eq.s32.totalorder %s185, 0
      %s188 = sadd.s32 %s187, 1
      %s189 = scalar_select %p186, %s187, %s188
      %p192 = pneg %p186
      %p193 = scmp.eq.s32.totalorder %s16, 1
      %p194 = por %p192, %p193
      %p195 = scmp.ne.s32.totalorder %s187, %s190
      %p196 = scmp.eq.s32.totalorder %s16, 0
      %p197 = por %p195, %p196
      %p198 = scmp.ne.s32.totalorder %s187, %s190
      %p199 = scmp.eq.s32.totalorder %s21, 1
      %p200 = por %p198, %p199
      %p201 = scmp.ne.s32.totalorder %s190, %s191
      %p202 = scmp.eq.s32.totalorder %s21, 0
      %p203 = por %p201, %p202
      %p204 = scmp.ne.s32.totalorder %s190, %s191
      %p205 = scmp.eq.s32.totalorder %s22, 1
      %p206 = por %p204, %p205
      %p208 = scmp.ne.s32.totalorder %s191, %s207
      %p209 = scmp.eq.s32.totalorder %s22, 0
      %p210 = por %p208, %p209
      %p211 = scmp.le.s32.totalorder 1, %s16
      %p212 = scmp.lt.s32.totalorder %s16, 3
      %p213 = pnand %p211, %p212
      %p214 = pneg %p213
      // Predicated region
      $region9: #{vector_quantize2_forward.1} parent=5 // pred_check
        _
      $region10: #{vector_quantize2_forward.1} parent=5 // pred_check_branch
        %216 = sbr.rel (%p213) target = $region12
      $region11: #{vector_quantize2_forward.1} parent=5 // pred_region
        %s217 = ssub.s32 %s16, 1
        // Predicated region
        $region13: #{vector_quantize2_forward.1} parent=11 // pred_check
          %p218 = pneg %p77
        $region14: #{vector_quantize2_forward.1} parent=11 // pred_check_branch
          %220 = sbr.rel (%p218) target = $region16
        $region15: #{vector_quantize2_forward.1} parent=11 // pred_region
          _
        $region16: #{vector_quantize2_forward.1} parent=11 // pred_fallthru
          _
        // Predicated region
        $region17: #{vector_quantize2_forward.1} parent=11 // pred_check
          %p221 = pneg %p98
        $region18: #{vector_quantize2_forward.1} parent=11 // pred_check_branch
          %223 = sbr.rel (%p221) target = $region20
        $region19: #{vector_quantize2_forward.1} parent=11 // pred_region
          _
        $region20: #{vector_quantize2_forward.1} parent=11 // pred_fallthru
          _
        // Predicated region
        $region21: #{vector_quantize2_forward.1} parent=11 // pred_check
          %p224 = pneg %p119
        $region22: #{vector_quantize2_forward.1} parent=11 // pred_check_branch
          %226 = sbr.rel (%p224) target = $region24
        $region23: #{vector_quantize2_forward.1} parent=11 // pred_region
          _
        $region24: #{vector_quantize2_forward.1} parent=11 // pred_fallthru
          _
      $region12: #{vector_quantize2_forward.1} parent=5 // pred_fallthru
        _
      %p227 = scmp.lt.s32.totalorder %s16, 2
      // Predicated region
      $region25: #{vector_quantize2_forward.1} parent=5 // pred_check
        %p228 = pneg %p227
      $region26: #{vector_quantize2_forward.1} parent=5 // pred_check_branch
        %230 = sbr.rel (%p228) target = $region28
      $region27: #{vector_quantize2_forward.1} parent=5 // pred_region
        // Predicated region
        $region29: #{vector_quantize2_forward.1} parent=27 // pred_check
          %p231 = pneg %p50
        $region30: #{vector_quantize2_forward.1} parent=27 // pred_check_branch
          %233 = sbr.rel (%p231) target = $region32
        $region31: #{vector_quantize2_forward.1} parent=27 // pred_region
          %s234 = smul.u32 2, %s24
          %p235 = scmp.lt.s32.totalorder %s23, 1
          %s236 = scalar_select %p235, %s23, 1
          %p237 = scmp.lt.s32.totalorder %s234, 1
          %s238 = scalar_select %p237, %s234, 1
          %s239 = smul.addr %s236, 2
          %s240 = sadd.s32 %s238, %s239
          %s241 = smul.addr %s240, 4
          %s242 = scalar_lea.vmem %s0, %s241
          %s243 = smul.u32 2, %s24
        $region32: #{vector_quantize2_forward.1} parent=27 // pred_fallthru
          _
      $region28: #{vector_quantize2_forward.1} parent=5 // pred_fallthru
        _
      %p244 = scmp.le.s32.totalorder 1, %s16
      %p245 = scmp.lt.s32.totalorder %s16, 3
      %p246 = pnand %p244, %p245
      %p247 = pneg %p246
      // Predicated region
      $region33: #{vector_quantize2_forward.1} parent=5 // pred_check
        _
      $region34: #{vector_quantize2_forward.1} parent=5 // pred_check_branch
        %249 = sbr.rel (%p246) target = $region36
      $region35: #{vector_quantize2_forward.1} parent=5 // pred_region
        %s250 = ssub.s32 %s16, 1
        %s251 = smul.u32 2, %s26
        %p252 = scmp.lt.s32.totalorder %s25, 1
        %s253 = scalar_select %p252, %s25, 1
        %p254 = scmp.lt.s32.totalorder %s251, 1
        %s255 = scalar_select %p254, %s251, 1
        %s256 = smul.addr %s253, 2
        %s257 = sadd.s32 %s255, %s256
        %s258 = smul.addr %s257, 4
        %s259 = scalar_lea.vmem %s0, %s258
        %p260 = pneg %p56
        %p261 = pneg %p53
        %p262 = pneg %p77
        %p263 = pneg %p74
        %p264 = pneg %p98
        %p265 = pneg %p95
        %p266 = pneg %p119
        %p267 = pneg %p116
        %p268 = pneg %p147
        %p269 = pneg %p144
        %s270 = smul.u32 2, %s26
        %p271 = scmp.lt.s32.totalorder %s25, 1
        %s272 = scalar_select %p271, %s25, 1
        %p273 = scmp.lt.s32.totalorder %s270, 1
        %s274 = scalar_select %p273, %s270, 1
        %s275 = smul.addr %s272, 2
        %s276 = sadd.s32 %s274, %s275
        %s277 = smul.addr %s276, 4
        %s278 = scalar_lea.vmem %s4, %s277
        %p279 = pneg %p175
        %p280 = pneg %p172
        %s281 = sand.u32 %s162, 1
        %s282 = scalar_lea.sflag [#allocation3], %s281
        %s283 = sand.u32 %s162, 1
        %s284 = smul.addr %s283, 2
        %s285 = scalar_lea.vmem [#allocation2], %s284
        %p286 = pneg %p203
        %p287 = pneg %p200
        %s288 = smul.u32 2, %s26
        %p289 = scmp.lt.s32.totalorder %s25, 1
        %s290 = scalar_select %p289, %s25, 1
        %p291 = scmp.lt.s32.totalorder %s288, 1
        %s292 = scalar_select %p291, %s288, 1
        %s293 = smul.addr %s290, 2
        %s294 = sadd.s32 %s292, %s293
        %s295 = smul.addr %s294, 2
        %s296 = scalar_lea.vmem %s6, %s295
        %s297 = smul.u32 2, %s26
        %p298 = scmp.lt.s32.totalorder %s25, 1
        %s299 = scalar_select %p298, %s25, 1
        %p300 = scmp.lt.s32.totalorder %s297, 1
        %s301 = scalar_select %p300, %s297, 1
        %s302 = smul.addr %s299, 2
        %s303 = sadd.s32 %s301, %s302
        %s304 = smul.addr %s303, 4
        %s305 = scalar_lea.vmem %s0, %s304
        %s306 = smul.u32 2, %s26
        %s307 = smul.u32 2, %s26
        %p308 = scmp.lt.s32.totalorder %s25, 1
        %s309 = scalar_select %p308, %s25, 1
        %p310 = scmp.lt.s32.totalorder %s307, 1
        %s311 = scalar_select %p310, %s307, 1
        %s312 = smul.addr %s309, 2
        %s313 = sadd.s32 %s311, %s312
        %s314 = smul.addr %s313, 4
        %s315 = scalar_lea.vmem %s4, %s314
        %s316 = smul.u32 2, %s26
        %s317 = smul.u32 2, %s26
        %s318 = smul.u32 2, %s26
        %p319 = scmp.lt.s32.totalorder %s25, 1
        %s320 = scalar_select %p319, %s25, 1
        %p321 = scmp.lt.s32.totalorder %s318, 1
        %s322 = scalar_select %p321, %s318, 1
        %s323 = smul.addr %s320, 2
        %s324 = sadd.s32 %s322, %s323
        %s325 = smul.addr %s324, 2
        %s326 = scalar_lea.vmem %s6, %s325
        %s327 = smul.u32 2, %s26
        %v328 = vld [vmem:[%s305] sm:$0xff]
        %v329 = vld [vmem:[%s1] sm:$0xff]
        %v330 = vld [vmem:[%s1 + $0x8] sm:$0xff]
        %v331 = vld [vmem:[%s2] sm:$0xf]
        %v332 = vld [vmem:[%s3] sm:$0xff]
        %v333 = vld [vmem:[%s3 + $0x8] sm:$0xff]
        %v335 = vcombine.high %v328, %v328
        %vm336 = vcmask 31744
        %v338 = vsel %vm336, %v329, 0
        %v341 = vsel %vm336, %v330, 0
        %vm343 = vcmask 1043456
        %v344 = vsel %vm343, %v328, 0
        %v346 = vsel %vm343, %v335, 0
        %348 = vmatprep.subr.mxu0 0.0
        %349 = vmatpush1.msra.mxu0 0.0
        %350 = vmatprep.subr.mxu0 0.0
        %351 = vmatpush1.msra.mxu0 0.0
        %352 = vmatprep.subr.mxu0 0.0
        %353 = vmatpush1.msra.mxu0 0.0
        %354 = vmatprep.subr.mxu0 0.0
        %355 = vmatpush1.msra.mxu0 0.0
        %356 = vmatprep.subr.mxu0 0.0
        %357 = vmatpush1.msra.mxu0 0.0
        %358 = vmatprep.subr.mxu0 0.0
        %359 = vmatpush1.msra.mxu0 0.0
        %360 = vmatprep.subr.mxu0 0.0
        %361 = vmatpush1.msra.mxu0 0.0
        %362 = vmatprep.subr.mxu0 0.0
        %363 = vmatpush1.msra.mxu0 0.0
        %364 = vmatprep.subr.mxu0 0.0
        %365 = vmatpush1.msra.mxu0 0.0
        %366 = vmatprep.subr.mxu0 0.0
        %367 = vmatpush1.msra.mxu0 0.0
        %368 = vmatprep.subr.mxu0 0.0
        %369 = vmatpush1.msra.mxu0 0.0
        %370 = vmatprep.subr.mxu0 0.0
        %371 = vmatpush1.msra.mxu0 0.0
        %372 = vmatprep.subr.mxu0 0.0
        %373 = vmatpush1.msra.mxu0 0.0
        %374 = vmatprep.subr.mxu0 0.0
        %375 = vmatpush1.msra.mxu0 0.0
        %376 = vmatprep.subr.mxu0 0.0
        %377 = vmatpush1.msra.mxu0 0.0
        %378 = vmatprep.subr.mxu0 %v346
        %379 = vmatpush1.msra.mxu0 %v344
        %380 = vmatprep.subr.mxu0 0.0
        %381 = vmatpush2.msra.mxu0 0.0
        %382 = vmatprep.subr.mxu0 0.0
        %383 = vmatpush2.msra.mxu0 0.0
        %384 = vmatprep.subr.mxu0 0.0
        %385 = vmatpush2.msra.mxu0 0.0
        %386 = vmatprep.subr.mxu0 0.0
        %387 = vmatpush2.msra.mxu0 0.0
        %388 = vmatprep.subr.mxu0 0.0
        %389 = vmatpush2.msra.mxu0 0.0
        %390 = vmatprep.subr.mxu0 0.0
        %391 = vmatpush2.msra.mxu0 0.0
        %392 = vmatprep.subr.mxu0 0.0
        %393 = vmatpush2.msra.mxu0 0.0
        %394 = vmatprep.subr.mxu0 0.0
        %395 = vmatpush2.msra.mxu0 0.0
        %396 = vmatprep.subr.mxu0 0.0
        %397 = vmatpush2.msra.mxu0 0.0
        %398 = vmatprep.subr.mxu0 0.0
        %399 = vmatpush2.msra.mxu0 0.0
        %400 = vmatprep.subr.mxu0 0.0
        %401 = vmatpush2.msra.mxu0 0.0
        %402 = vmatprep.subr.mxu0 0.0
        %403 = vmatpush2.msra.mxu0 0.0
        %404 = vmatprep.subr.mxu0 0.0
        %405 = vmatpush2.msra.mxu0 0.0
        %406 = vmatprep.subr.mxu0 0.0
        %407 = vmatpush2.msra.mxu0 0.0
        %408 = vmatprep.subr.mxu0 0.0
        %409 = vmatpush2.msra.mxu0 0.0
        %410 = vmatprep.subr.mxu0 0.0
        %411 = vmatpush2.msra.mxu0 0.0
        %412 = vmatprep.mubr.f32.mxu0 0.0
        %413 = vmatmul.mubr.f32.gmra.mxu0 %v338
        %v414 = vpop.f32.mrf.mxu0
        %v415 = vadd.f32 0.0, %v414
        %v416 = vpop.f32.mrf.mxu0
        %v417 = vadd.f32 0.0, %v416
        %418 = vmatprep.mubr.f32.mxu0 0.0
        %419 = vmatmul.mubr.f32.gmra.mxu0 %v341
        %v420 = vpop.f32.mrf.mxu0
        %v421 = vadd.f32 0.0, %v420
        %v422 = vpop.f32.mrf.mxu0
        %v423 = vadd.f32 0.0, %v422
        %424 = vdwg.mxu0
        %v425 = vmul.f32 %v415, 2.0
        %v426 = vmul.f32 %v417, 2.0
        %v427 = vmul.f32 %v421, 2.0
        %v428 = vmul.f32 %v423, 2.0
        %430 = vset.pattern.permute.xlu0 0
        %431 = vperm.xlu0 %430, %v332
        %v432 = vpop.permute.xlu0 %431
        %435 = vset.pattern.permute.xlu0 0
        %436 = vperm.xlu0 %435, %v333
        %v437 = vpop.permute.xlu0 %436
        %v439 = vsub.f32 %v432, %v425
        %v440 = vsub.f32 %v432, %v426
        %v441 = vsub.f32 %v437, %v427
        %v442 = vsub.f32 %v437, %v428
        %v443 = vmin.f32 %v439, %v441
        %v444 = vrot.slane %v443, 4
        %v445 = vmin.f32 %v443, %v444
        %v446 = vrot.slane %v445, 2
        %v447 = vmin.f32 %v445, %v446
        %v448 = vrot.slane %v447, 1
        %v449 = vmin.f32 %v447, %v448
        %v450 = vmin.f32 %v440, %v442
        %v451 = vrot.slane %v450, 4
        %v452 = vmin.f32 %v450, %v451
        %v453 = vrot.slane %v452, 2
        %v454 = vmin.f32 %v452, %v453
        %v455 = vrot.slane %v454, 1
        %v456 = vmin.f32 %v454, %v455
        %v457 = vlaneseq
        %v458 = vshrl.u32 %v457, 7
        %v459 = vadd.s32 %v458, 8
        %vm460 = vcmp.eq.f32.partialorder %v439, %v449
        %vm461 = vcmp.eq.f32.partialorder %v440, %v456
        %vm462 = vcmp.eq.f32.partialorder %v441, %v449
        %vm463 = vcmp.eq.f32.partialorder %v442, %v456
        %v464 = vsel %vm460, %v458, 16
        %v465 = vsel %vm461, %v458, 16
        %v466 = vsel %vm462, %v459, 16
        %v467 = vsel %vm463, %v459, 16
        %vm468 = vcmp.lt.s32.totalorder %v464, %v466
        %v469 = vsel %vm468, %v464, %v466
        %v470 = vrot.slane %v469, 4
        %vm471 = vcmp.lt.s32.totalorder %v469, %v470
        %v472 = vsel %vm471, %v469, %v470
        %v473 = vrot.slane %v472, 2
        %vm474 = vcmp.lt.s32.totalorder %v472, %v473
        %v475 = vsel %vm474, %v472, %v473
        %v476 = vrot.slane %v475, 1
        %vm477 = vcmp.lt.s32.totalorder %v475, %v476
        %v478 = vsel %vm477, %v475, %v476
        %vm479 = vcmp.lt.s32.totalorder %v465, %v467
        %v480 = vsel %vm479, %v465, %v467
        %v481 = vrot.slane %v480, 4
        %vm482 = vcmp.lt.s32.totalorder %v480, %v481
        %v483 = vsel %vm482, %v480, %v481
        %v484 = vrot.slane %v483, 2
        %vm485 = vcmp.lt.s32.totalorder %v483, %v484
        %v486 = vsel %vm485, %v483, %v484
        %v487 = vrot.slane %v486, 1
        %vm488 = vcmp.lt.s32.totalorder %v486, %v487
        %v489 = vsel %vm488, %v486, %v487
        %v490 = vcombine.low %v478, %v489
        %v492 = vunpack.c.l.s4 1966171168
        %v493 = vunpack.c.0.s8 %v492
        %v494 = vlaneseq
        %v495 = vshrl.u32 %v494, 7
        %v496 = vsub.s32 %v493, %v495
        %v497 = vrot.slane %v490, %v496
        %v499 = vunpack.c.l.s4 1966171168
        %v500 = vunpack.c.0.s8 %v499
        %v501 = vlaneseq
        %v502 = vshrl.u32 %v501, 7
        %v503 = vsub.s32 %v500, %v502
        %v504 = vrot.slane %v497, %v503
        %v505 = vlaneseq
        %vm506 = vcmp.ge.s32.totalorder %v505, 0
        %vm507 = vcmp.lt.s32.totalorder %v505, 256
        %vm508 = vmand %vm506, %vm507
        %509 = vst.msk [vmem:[%s285] sm:$0x3] %vm508, %v504
        %vm510 = vcmp.eq.s32.totalorder %v458, %v478
        %vm511 = vcmp.eq.s32.totalorder %v458, %v489
        %vm512 = vcmp.eq.s32.totalorder %v459, %v478
        %vm513 = vcmp.eq.s32.totalorder %v459, %v489
        %v514 = vsel %vm510, 1, 0
        %v515 = vsel %vm511, 1, 0
        %v516 = vsel %vm512, 1, 0
        %v517 = vsel %vm513, 1, 0
        %v518 = vcvt.s32.f32 %v514
        %v519 = vcvt.s32.f32 %v515
        %v520 = vcvt.s32.f32 %v516
        %v521 = vcvt.s32.f32 %v517
        %vm522 = vcmask 130048
        %v524 = vsel %vm522, %v331, 0
        %526 = vmatprep.subr.mxu0 0.0
        %527 = vmatpush1.msra.mxu0 0.0
        %528 = vmatprep.subr.mxu0 0.0
        %529 = vmatpush1.msra.mxu0 0.0
        %530 = vmatprep.subr.mxu0 0.0
        %531 = vmatpush1.msra.mxu0 0.0
        %532 = vmatprep.subr.mxu0 0.0
        %533 = vmatpush1.msra.mxu0 0.0
        %534 = vmatprep.subr.mxu0 0.0
        %535 = vmatpush1.msra.mxu0 0.0
        %536 = vmatprep.subr.mxu0 0.0
        %537 = vmatpush1.msra.mxu0 0.0
        %538 = vmatprep.subr.mxu0 0.0
        %539 = vmatpush1.msra.mxu0 0.0
        %540 = vmatprep.subr.mxu0 0.0
        %541 = vmatpush1.msra.mxu0 0.0
        %542 = vmatprep.subr.mxu0 0.0
        %543 = vmatpush1.msra.mxu0 0.0
        %544 = vmatprep.subr.mxu0 0.0
        %545 = vmatpush1.msra.mxu0 0.0
        %546 = vmatprep.subr.mxu0 0.0
        %547 = vmatpush1.msra.mxu0 0.0
        %548 = vmatprep.subr.mxu0 0.0
        %549 = vmatpush1.msra.mxu0 0.0
        %550 = vmatprep.subr.mxu0 0.0
        %551 = vmatpush1.msra.mxu0 0.0
        %552 = vmatprep.subr.mxu0 0.0
        %553 = vmatpush1.msra.mxu0 0.0
        %554 = vmatprep.subr.mxu0 %v521
        %555 = vmatpush1.msra.mxu0 %v520
        %556 = vmatprep.subr.mxu0 %v519
        %557 = vmatpush1.msra.mxu0 %v518
        %558 = vmatprep.subr.mxu0 0.0
        %559 = vmatpush2.msra.mxu0 0.0
        %560 = vmatprep.subr.mxu0 0.0
        %561 = vmatpush2.msra.mxu0 0.0
        %562 = vmatprep.subr.mxu0 0.0
        %563 = vmatpush2.msra.mxu0 0.0
        %564 = vmatprep.subr.mxu0 0.0
        %565 = vmatpush2.msra.mxu0 0.0
        %566 = vmatprep.subr.mxu0 0.0
        %567 = vmatpush2.msra.mxu0 0.0
        %568 = vmatprep.subr.mxu0 0.0
        %569 = vmatpush2.msra.mxu0 0.0
        %570 = vmatprep.subr.mxu0 0.0
        %571 = vmatpush2.msra.mxu0 0.0
        %572 = vmatprep.subr.mxu0 0.0
        %573 = vmatpush2.msra.mxu0 0.0
        %574 = vmatprep.subr.mxu0 0.0
        %575 = vmatpush2.msra.mxu0 0.0
        %576 = vmatprep.subr.mxu0 0.0
        %577 = vmatpush2.msra.mxu0 0.0
        %578 = vmatprep.subr.mxu0 0.0
        %579 = vmatpush2.msra.mxu0 0.0
        %580 = vmatprep.subr.mxu0 0.0
        %581 = vmatpush2.msra.mxu0 0.0
        %582 = vmatprep.subr.mxu0 0.0
        %583 = vmatpush2.msra.mxu0 0.0
        %584 = vmatprep.subr.mxu0 0.0
        %585 = vmatpush2.msra.mxu0 0.0
        %586 = vmatprep.subr.mxu0 0.0
        %587 = vmatpush2.msra.mxu0 0.0
        %588 = vmatprep.subr.mxu0 0.0
        %589 = vmatpush2.msra.mxu0 0.0
        %590 = vmatprep.mubr.f32.mxu0 0.0
        %591 = vmatmul.mubr.f32.gmra.mxu0 %v524
        %v592 = vpop.f32.mrf.mxu0
        %v593 = vadd.f32 0.0, %v592
        %v594 = vpop.f32.mrf.mxu0
        %v595 = vadd.f32 0.0, %v594
        %596 = vdwg.mxu0
        %v599 = vcombine.low %v593, %v595
        %601 = vst [vmem:[%s315] sm:$0xff] %v599
        %v603 = vsub.f32 %v593, %v328
        %v604 = vsub.f32 %v595, %v335
        %v605 = vsel %vm343, %v603, 0.0
        %v606 = vrot.slane %v605, 4
        %v607 = vadd.f32 %v605, %v606
        %v608 = vrot.slane %v607, 2
        %v609 = vadd.f32 %v607, %v608
        %v610 = vrot.slane %v609, 1
        %v611 = vadd.f32 %v609, %v610
        %v612 = vsel %vm343, %v604, 0.0
        %v613 = vrot.slane %v612, 4
        %v614 = vadd.f32 %v612, %v613
        %v615 = vrot.slane %v614, 2
        %v616 = vadd.f32 %v614, %v615
        %v617 = vrot.slane %v616, 1
        %v618 = vadd.f32 %v616, %v617
        %v619 = vmul.f32 %v603, %v603
        %v620 = vmul.f32 %v604, %v604
        %v621 = vsel %vm343, %v619, 0.0
        %v622 = vrot.slane %v621, 4
        %v623 = vadd.f32 %v621, %v622
        %v624 = vrot.slane %v623, 2
        %v625 = vadd.f32 %v623, %v624
        %v626 = vrot.slane %v625, 1
        %v627 = vadd.f32 %v625, %v626
        %v628 = vsel %vm343, %v620, 0.0
        %v629 = vrot.slane %v628, 4
        %v630 = vadd.f32 %v628, %v629
        %v631 = vrot.slane %v630, 2
        %v632 = vadd.f32 %v630, %v631
        %v633 = vrot.slane %v632, 1
        %v634 = vadd.f32 %v632, %v633
        %vm635 = vcmp.eq.s32.totalorder %v458, 0
        %v636 = vsel %vm635, %v611, %v627
        %v637 = vsel %vm635, %v618, %v634
        %v640 = vcombine.low %v636, %v637
        %v642 = vunpack.c.l.s4 1983009808
        %v643 = vunpack.c.0.s8 %v642
        %v644 = vlaneseq
        %v645 = vshrl.u32 %v644, 7
        %v646 = vsub.s32 %v643, %v645
        %v647 = vrot.slane %v640, %v646
        %649 = vst [vmem:[%s326] sm:$0xf] %v647
        %s650 = smul.u32 2, %s26
        %p651 = scmp.lt.s32.totalorder %s25, 1
        %s652 = scalar_select %p651, %s25, 1
        %p653 = scmp.lt.s32.totalorder %s650, 1
        %s654 = scalar_select %p653, %s650, 1
        %s655 = smul.addr %s652, 2
        %s656 = sadd.s32 %s654, %s655
        %s657 = smul.addr %s656, 4
        %s658 = scalar_lea.vmem %s4, %s657
        %s659 = sand.u32 %s162, 1
        %s660 = scalar_lea.sflag [#allocation3], %s659
        %s661 = sand.u32 %s162, 1
        %s662 = smul.addr %s661, 2
        %s663 = scalar_lea.vmem [#allocation2], %s662
        %s664 = smul.u32 2, %s26
        %p665 = scmp.lt.s32.totalorder %s25, 1
        %s666 = scalar_select %p665, %s25, 1
        %p667 = scmp.lt.s32.totalorder %s664, 1
        %s668 = scalar_select %p667, %s664, 1
        %s669 = smul.addr %s666, 2
        %s670 = sadd.s32 %s668, %s669
        %s671 = smul.addr %s670, 2
        %s672 = scalar_lea.vmem %s6, %s671
        // Predicated region
        $region37: #{vector_quantize2_forward.1} parent=35 // pred_check
          %p673 = pneg %p144
        $region38: #{vector_quantize2_forward.1} parent=35 // pred_check_branch
          %675 = sbr.rel (%p673) target = $region40
        $region39: #{vector_quantize2_forward.1} parent=35 // pred_region
          %s676 = smul.u32 2, %s26
        $region40: #{vector_quantize2_forward.1} parent=35 // pred_fallthru
          _
        // Predicated region
        $region41: #{vector_quantize2_forward.1} parent=35 // pred_check
          %p677 = pneg %p172
        $region42: #{vector_quantize2_forward.1} parent=35 // pred_check_branch
          %679 = sbr.rel (%p677) target = $region44
        $region43: #{vector_quantize2_forward.1} parent=35 // pred_region
          %s680 = smul.u32 2, %s26
          %s682 = ssub.s32 32, 32
          %683 = vsyncadd %s660, %s682
          %s684 = smul.addr %s25, 2
          %s685 = sadd.s32 %s680, %s684
          %s686 = smul.addr %s685, 16
          %s687 = scalar_lea.hbm %s5, %s686
          %s689 = sshll.u32 %s663, 4
          %s690 = int_to_ptr.vmem [resolvable:$true] %s689
          %692 = dma.vmem_to_hbm [thread:$0]  %s690, 32, %s687, %s660
        $region44: #{vector_quantize2_forward.1} parent=35 // pred_fallthru
          _
        // Predicated region
        $region45: #{vector_quantize2_forward.1} parent=35 // pred_check
          %p693 = pneg %p200
        $region46: #{vector_quantize2_forward.1} parent=35 // pred_check_branch
          %695 = sbr.rel (%p693) target = $region48
        $region47: #{vector_quantize2_forward.1} parent=35 // pred_region
          %s696 = smul.u32 2, %s26
        $region48: #{vector_quantize2_forward.1} parent=35 // pred_fallthru
          _
      $region36: #{vector_quantize2_forward.1} parent=5 // pred_fallthru
        _
      %p697 = scmp.le.s32.totalorder 2, %s16
      // Predicated region
      $region49: #{vector_quantize2_forward.1} parent=5 // pred_check
        %p698 = pneg %p697
      $region50: #{vector_quantize2_forward.1} parent=5 // pred_check_branch
        %700 = sbr.rel (%p698) target = $region52
      $region51: #{vector_quantize2_forward.1} parent=5 // pred_region
        %s701 = ssub.s32 %s16, 2
        // Predicated region
        $region53: #{vector_quantize2_forward.1} parent=51 // pred_check
          %p702 = pneg %p150
        $region54: #{vector_quantize2_forward.1} parent=51 // pred_check_branch
          %704 = sbr.rel (%p702) target = $region56
        $region55: #{vector_quantize2_forward.1} parent=51 // pred_region
          %s705 = smul.u32 2, %s28
          %p706 = scmp.lt.s32.totalorder %s27, 1
          %s707 = scalar_select %p706, %s27, 1
          %p708 = scmp.lt.s32.totalorder %s705, 1
          %s709 = scalar_select %p708, %s705, 1
          %s710 = smul.addr %s707, 2
          %s711 = sadd.s32 %s709, %s710
          %s712 = smul.addr %s711, 4
          %s713 = scalar_lea.vmem %s4, %s712
        $region56: #{vector_quantize2_forward.1} parent=51 // pred_fallthru
          _
        // Predicated region
        $region57: #{vector_quantize2_forward.1} parent=51 // pred_check
          %p714 = pneg %p178
        $region58: #{vector_quantize2_forward.1} parent=51 // pred_check_branch
          %716 = sbr.rel (%p714) target = $region60
        $region59: #{vector_quantize2_forward.1} parent=51 // pred_region
          %s717 = sand.u32 %s163, 1
          %s718 = scalar_lea.sflag [#allocation3], %s717
          %s719 = sand.u32 %s163, 1
          %s720 = smul.addr %s719, 2
          %s721 = scalar_lea.vmem [#allocation2], %s720
          %722 = dma.done %s718, 32
        $region60: #{vector_quantize2_forward.1} parent=51 // pred_fallthru
          _
        // Predicated region
        $region61: #{vector_quantize2_forward.1} parent=51 // pred_check
          %p723 = pneg %p206
        $region62: #{vector_quantize2_forward.1} parent=51 // pred_check_branch
          %725 = sbr.rel (%p723) target = $region64
        $region63: #{vector_quantize2_forward.1} parent=51 // pred_region
          %s726 = smul.u32 2, %s28
          %p727 = scmp.lt.s32.totalorder %s27, 1
          %s728 = scalar_select %p727, %s27, 1
          %p729 = scmp.lt.s32.totalorder %s726, 1
          %s730 = scalar_select %p729, %s726, 1
          %s731 = smul.addr %s728, 2
          %s732 = sadd.s32 %s730, %s731
          %s733 = smul.addr %s732, 2
          %s734 = scalar_lea.vmem %s6, %s733
        $region64: #{vector_quantize2_forward.1} parent=51 // pred_fallthru
          _
      $region52: #{vector_quantize2_forward.1} parent=5 // pred_fallthru
        _
    $region6: #{vector_quantize2_forward.1} parent=1 // loop_footer
      %s20 = sadd.s32 1, %s16
    $region7: #{vector_quantize2_forward.1} parent=1 // loop_footer_branch
      %15 = sbr.rel target = $region3
    $region8: #{vector_quantize2_forward.1} parent=1 // loop_exit
      _
    %735 = vsyncpa [#allocation3], 1
    %s736 = scalar_lea.sflag [#allocation3], 1
    %737 = vsyncpa %s736, 1

</llo_original>
